<compile_context>
chip_gen: v7x
topology: tpu7x:2x2x1
jax: 0.10.0
libtpu: 0.0.40
codegen_flags: <defaults>
</compile_context>

<pallas_src>
import jax
import jax.numpy as jnp
from jax.experimental import pallas as pl
from jax.experimental.pallas import tpu as pltpu


def _round_up(a, m):
    return ((a + m - 1) // m) * m


def qnet_kernel(x_ref, w1_ref, b1_ref, w2_ref, b2_ref, w3_ref, b3_ref, out_ref):
    # Layer 1 in f32 (state_size is tiny -> negligible MXU cost, better accuracy).
    h1 = jnp.dot(x_ref[...], w1_ref[...], preferred_element_type=jnp.float32)
    h1 = jnp.maximum(h1 + b1_ref[...], 0.0)
    # Layer 2: bf16 MXU operands, f32 accumulation.
    h2 = jnp.dot(h1.astype(jnp.bfloat16), w2_ref[...],
                 preferred_element_type=jnp.float32)
    h2 = jnp.maximum(h2 + b2_ref[...], 0.0)
    # Layer 3 (no activation); narrow (action_size) output lanes stored directly.
    out = jnp.dot(h2.astype(jnp.bfloat16), w3_ref[...],
                  preferred_element_type=jnp.float32)
    out_ref[...] = (out + b3_ref[...]).astype(out_ref.dtype)


def prepare_qnet_params(params):
    """One-time param prep (hoisted out of the per-call path):
    layer 1 stays f32, layers 2/3 become bf16 MXU operands, biases (1, n) f32."""
    return {
        "w1": params["w1"].astype(jnp.float32),
        "b1": params["b1"].reshape(1, -1).astype(jnp.float32),
        "w2": params["w2"].astype(jnp.bfloat16),
        "b2": params["b2"].reshape(1, -1).astype(jnp.float32),
        "w3": params["w3"].astype(jnp.bfloat16),
        "b3": params["b3"].reshape(1, -1).astype(jnp.float32),
    }


def qnet_forward(x, prepared, *, max_batch_tile=1024):
    """x: (B, state_size) f32; prepared: output of prepare_qnet_params.

    Returns (B, action_size) f32.
    """
    B, S = x.shape
    H = prepared["w1"].shape[1]
    A = prepared["w3"].shape[1]

    # Batch tile: large enough to amortize per-step overhead, but capped at
    # ~ceil(B/2) (rounded to a sublane multiple) so the grid has >= 2 steps on
    # moderate batches and the "parallel" axis splits across v7x's two cores.
    half = -(-B // 2)
    TB = max(8, min(max_batch_tile, _round_up(half, 8)))
    grid = (pl.cdiv(B, TB),)

    flops = 2 * B * (S * H + H * H + H * A)
    bytes_accessed = (
        B * S * 4                                       # f32 x in
        + prepared["w1"].size * 4                       # f32 w1
        + (prepared["w2"].size + prepared["w3"].size) * 2   # bf16 w2/w3
        + (prepared["b1"].size + prepared["b2"].size
           + prepared["b3"].size) * 4                   # f32 biases
        + B * A * 4                                     # f32 output
    )

    out = pl.pallas_call(
        qnet_kernel,
        out_shape=jax.ShapeDtypeStruct((B, A), jnp.float32),
        grid=grid,
        in_specs=[
            pl.BlockSpec((TB, S), lambda b: (b, 0)),   # x: tiled over batch
            pl.BlockSpec((S, H), lambda b: (0, 0)),    # w1: resident (f32)
            pl.BlockSpec((1, H), lambda b: (0, 0)),    # b1: resident
            pl.BlockSpec((H, H), lambda b: (0, 0)),    # w2: resident (bf16)
            pl.BlockSpec((1, H), lambda b: (0, 0)),    # b2: resident
            pl.BlockSpec((H, A), lambda b: (0, 0)),    # w3: resident (bf16)
            pl.BlockSpec((1, A), lambda b: (0, 0)),    # b3: resident
        ],
        out_specs=pl.BlockSpec((TB, A), lambda b: (b, 0)),
        compiler_params=pltpu.CompilerParams(
            dimension_semantics=("parallel",)),        # megacore split on v7x
        cost_estimate=pl.CostEstimate(
            flops=flops, transcendentals=0, bytes_accessed=bytes_accessed),
    )(x, prepared["w1"], prepared["b1"], prepared["w2"], prepared["b2"],
      prepared["w3"], prepared["b3"])

    return out


def init_qnet_params(key, state_size, action_size, hidden=128):
    """Deterministic init mimicking PyTorch nn.Linear default:
    U(-1/sqrt(fan_in), 1/sqrt(fan_in)) for both weight and bias."""
    def linear(k, fan_in, fan_out):
        kw, kb = jax.random.split(k)
        bound = 1.0 / jnp.sqrt(fan_in)
        w = jax.random.uniform(kw, (fan_in, fan_out), jnp.float32, -bound, bound)
        b = jax.random.uniform(kb, (1, fan_out), jnp.float32, -bound, bound)
        return w, b

    k1, k2, k3 = jax.random.split(key, 3)
    w1, b1 = linear(k1, state_size, hidden)
    w2, b2 = linear(k2, hidden, hidden)
    w3, b3 = linear(k3, hidden, action_size)
    return {"w1": w1, "b1": b1, "w2": w2, "b2": b2, "w3": w3, "b3": b3}


def qnet_reference(x, params):
    """Pure-JAX f32 reference for correctness checking."""
    h = jnp.maximum(x @ params["w1"] + params["b1"], 0.0)
    h = jnp.maximum(h @ params["w2"] + params["b2"], 0.0)
    return h @ params["w3"] + params["b3"]


if __name__ == "__main__":
    key = jax.random.PRNGKey(0)
    k_params, k_x1, k_x2 = jax.random.split(key, 3)

    state_size = 8      # cfg.state_size (small synthetic choice)
    action_size = 4
    batch = 2

    params = init_qnet_params(k_params, state_size, action_size)
    prepared = prepare_qnet_params(params)

    # Small batch (single grid step, partial tile).
    x = jax.random.normal(k_x1, (batch, state_size), jnp.float32)
    out = jax.block_until_ready(qnet_forward(x, prepared))
    ref = qnet_reference(x, params)
    assert out.shape == (batch, action_size)
    # bf16 MXU operands on layers 2/3 => loosened tolerance vs the f32 reference.
    assert jnp.allclose(out, ref, atol=5e-2, rtol=5e-2), (
        f"max abs err {jnp.max(jnp.abs(out - ref))}")

    # Ragged batch (multiple grid steps, partial last tile) — asserts that the
    # masked boundary rows never leak into valid output rows.
    x2 = jax.random.normal(k_x2, (10, state_size), jnp.float32)
    out2 = jax.block_until_ready(qnet_forward(x2, prepared))
    ref2 = qnet_reference(x2, params)
    assert out2.shape == (10, action_size)
    assert jnp.allclose(out2, ref2, atol=5e-2, rtol=5e-2), (
        f"max abs err {jnp.max(jnp.abs(out2 - ref2))}")

    print("KERNEL_OK")
</pallas_src>

<mosaic_0001>
module attributes {stable_mosaic.version = 11 : i64} {
  func.func @qnet_kernel(%arg0: i32, %arg1: memref<8x8xf32, #tpu.memory_space<vmem>>, %arg2: memref<8x128xf32, #tpu.memory_space<vmem>>, %arg3: memref<1x128xf32, #tpu.memory_space<vmem>>, %arg4: memref<128x128xbf16, #tpu.memory_space<vmem>>, %arg5: memref<1x128xf32, #tpu.memory_space<vmem>>, %arg6: memref<128x4xbf16, #tpu.memory_space<vmem>>, %arg7: memref<1x4xf32, #tpu.memory_space<vmem>>, %arg8: memref<8x4xf32, #tpu.memory_space<vmem>>) attributes {dimension_semantics = [#tpu.dimension_semantics<parallel>], iteration_bounds = array<i64: 1>, scalar_prefetch = 0 : i64, scratch_operands = 0 : i64, tpu.core_type = #tpu.core_type<tc>, window_params = [{transform_indices = @transform_0, window_bounds = array<i64: 8, 8>}, {pipeline_mode = #tpu.pipeline_mode<synchronous>, transform_indices = @transform_1, window_bounds = array<i64: 8, 128>}, {pipeline_mode = #tpu.pipeline_mode<synchronous>, transform_indices = @transform_2, window_bounds = array<i64: 1, 128>}, {pipeline_mode = #tpu.pipeline_mode<synchronous>, transform_indices = @transform_3, window_bounds = array<i64: 128, 128>}, {pipeline_mode = #tpu.pipeline_mode<synchronous>, transform_indices = @transform_4, window_bounds = array<i64: 1, 128>}, {pipeline_mode = #tpu.pipeline_mode<synchronous>, transform_indices = @transform_5, window_bounds = array<i64: 128, 4>}, {pipeline_mode = #tpu.pipeline_mode<synchronous>, transform_indices = @transform_6, window_bounds = array<i64: 1, 4>}, {transform_indices = @transform_7, window_bounds = array<i64: 8, 4>}]} {
    %c0 = arith.constant 0 : index
    %c0_0 = arith.constant 0 : index
    %0 = vector.load %arg1[%c0, %c0_0] : memref<8x8xf32, #tpu.memory_space<vmem>>, vector<8x8xf32>
    %c0_1 = arith.constant 0 : index
    %c0_2 = arith.constant 0 : index
    %1 = vector.load %arg2[%c0_1, %c0_2] : memref<8x128xf32, #tpu.memory_space<vmem>>, vector<8x128xf32>
    %cst = arith.constant dense<0.000000e+00> : vector<8x128xf32>
    %2 = tpu.matmul %0, %1, %cst {dimension_numbers = #tpu.dot_dimension_numbers<[1], [0], [0], [1], [0, 0, 1, 1], [], []>} : vector<8x8xf32>, vector<8x128xf32>, vector<8x128xf32> -> vector<8x128xf32>
    %c0_3 = arith.constant 0 : index
    %c0_4 = arith.constant 0 : index
    %3 = vector.load %arg3[%c0_3, %c0_4] : memref<1x128xf32, #tpu.memory_space<vmem>>, vector<1x128xf32>
    %4 = vector.broadcast %3 : vector<1x128xf32> to vector<8x128xf32>
    %5 = arith.addf %2, %4 : vector<8x128xf32>
    %cst_5 = arith.constant 0.000000e+00 : f32
    %6 = vector.broadcast %cst_5 : f32 to vector<8x128xf32>
    %7 = arith.maximumf %5, %6 : vector<8x128xf32>
    %8 = arith.truncf %7 : vector<8x128xf32> to vector<8x128xbf16>
    %c0_6 = arith.constant 0 : index
    %c0_7 = arith.constant 0 : index
    %9 = vector.load %arg4[%c0_6, %c0_7] : memref<128x128xbf16, #tpu.memory_space<vmem>>, vector<128x128xbf16>
    %cst_8 = arith.constant dense<0.000000e+00> : vector<8x128xf32>
    %10 = tpu.matmul %8, %9, %cst_8 {dimension_numbers = #tpu.dot_dimension_numbers<[1], [0], [0], [1], [0, 0, 1, 1], [], []>} : vector<8x128xbf16>, vector<128x128xbf16>, vector<8x128xf32> -> vector<8x128xf32>
    %c0_9 = arith.constant 0 : index
    %c0_10 = arith.constant 0 : index
    %11 = vector.load %arg5[%c0_9, %c0_10] : memref<1x128xf32, #tpu.memory_space<vmem>>, vector<1x128xf32>
    %12 = vector.broadcast %11 : vector<1x128xf32> to vector<8x128xf32>
    %13 = arith.addf %10, %12 : vector<8x128xf32>
    %cst_11 = arith.constant 0.000000e+00 : f32
    %14 = vector.broadcast %cst_11 : f32 to vector<8x128xf32>
    %15 = arith.maximumf %13, %14 : vector<8x128xf32>
    %16 = arith.truncf %15 : vector<8x128xf32> to vector<8x128xbf16>
    %c0_12 = arith.constant 0 : index
    %c0_13 = arith.constant 0 : index
    %17 = vector.load %arg6[%c0_12, %c0_13] : memref<128x4xbf16, #tpu.memory_space<vmem>>, vector<128x4xbf16>
    %cst_14 = arith.constant dense<0.000000e+00> : vector<8x4xf32>
    %18 = tpu.matmul %16, %17, %cst_14 {dimension_numbers = #tpu.dot_dimension_numbers<[1], [0], [0], [1], [0, 0, 1, 1], [], []>} : vector<8x128xbf16>, vector<128x4xbf16>, vector<8x4xf32> -> vector<8x4xf32>
    %c0_15 = arith.constant 0 : index
    %c0_16 = arith.constant 0 : index
    %19 = vector.load %arg7[%c0_15, %c0_16] : memref<1x4xf32, #tpu.memory_space<vmem>>, vector<1x4xf32>
    %20 = vector.broadcast %19 : vector<1x4xf32> to vector<8x4xf32>
    %21 = arith.addf %18, %20 : vector<8x4xf32>
    %c0_17 = arith.constant 0 : index
    %c0_18 = arith.constant 0 : index
    %22 = vector.load %arg8[%c0_17, %c0_18] : memref<8x4xf32, #tpu.memory_space<vmem>>, vector<8x4xf32>
    tpu.vector_store %arg8[%c0_17, %c0_18], %21 {strides = array<i32>} : memref<8x4xf32, #tpu.memory_space<vmem>>, vector<8x4xf32>,
    return
  }
  func.func @transform_0(%arg0: i32) -> (i32, i32) {
    %c0_i32 = arith.constant 0 : i32
    %c0_i32_0 = arith.constant 0 : i32
    return %arg0, %c0_i32 : i32, i32
  }
  func.func @transform_1(%arg0: i32) -> (i32, i32) {
    %c0_i32 = arith.constant 0 : i32
    %c0_i32_0 = arith.constant 0 : i32
    %c0_i32_1 = arith.constant 0 : i32
    return %c0_i32, %c0_i32_0 : i32, i32
  }
  func.func @transform_2(%arg0: i32) -> (i32, i32) {
    %c0_i32 = arith.constant 0 : i32
    %c0_i32_0 = arith.constant 0 : i32
    %c0_i32_1 = arith.constant 0 : i32
    return %c0_i32, %c0_i32_0 : i32, i32
  }
  func.func @transform_3(%arg0: i32) -> (i32, i32) {
    %c0_i32 = arith.constant 0 : i32
    %c0_i32_0 = arith.constant 0 : i32
    %c0_i32_1 = arith.constant 0 : i32
    return %c0_i32, %c0_i32_0 : i32, i32
  }
  func.func @transform_4(%arg0: i32) -> (i32, i32) {
    %c0_i32 = arith.constant 0 : i32
    %c0_i32_0 = arith.constant 0 : i32
    %c0_i32_1 = arith.constant 0 : i32
    return %c0_i32, %c0_i32_0 : i32, i32
  }
  func.func @transform_5(%arg0: i32) -> (i32, i32) {
    %c0_i32 = arith.constant 0 : i32
    %c0_i32_0 = arith.constant 0 : i32
    %c0_i32_1 = arith.constant 0 : i32
    return %c0_i32, %c0_i32_0 : i32, i32
  }
  func.func @transform_6(%arg0: i32) -> (i32, i32) {
    %c0_i32 = arith.constant 0 : i32
    %c0_i32_0 = arith.constant 0 : i32
    %c0_i32_1 = arith.constant 0 : i32
    return %c0_i32, %c0_i32_0 : i32, i32
  }
  func.func @transform_7(%arg0: i32) -> (i32, i32) {
    %c0_i32 = arith.constant 0 : i32
    %c0_i32_0 = arith.constant 0 : i32
    return %arg0, %c0_i32 : i32, i32
  }
}

</mosaic_0001>

<llo_original>
// kernel: tpu_custom_call.1
$region0: #{tpu_custom_call.1}
  #allocation0 [shape = 'u32[]', space=smem, size = 0x4, offset = 0x4, fixed_abs, tag = 'smem constant byte address 0x4 - core index']
  #allocation1 [shape = 'u32[144,128]{1,0:T(1,128)}', space=vmem, size = 0x12000, scoped, tag = 'internal scratch']
  %s0 = inlined_call_operand.vmem [shape: f32[2,8], index: 0, kind: input, shape index: {}]
  %s1 = inlined_call_operand.vmem [shape: f32[8,128], index: 1, kind: input, shape index: {}]
  %s2 = inlined_call_operand.vmem [shape: f32[1,128], index: 2, kind: input, shape index: {}]
  %s3 = inlined_call_operand.vmem [shape: bf16[128,128], index: 3, kind: input, shape index: {}]
  %s4 = inlined_call_operand.vmem [shape: f32[1,128], index: 4, kind: input, shape index: {}]
  %s5 = inlined_call_operand.vmem [shape: bf16[128,4], index: 5, kind: input, shape index: {}]
  %s6 = inlined_call_operand.vmem [shape: f32[1,4], index: 6, kind: input, shape index: {}]
  %s7 = inlined_call_operand.hbm [shape: f32[2,4], index: 7, kind: output, shape index: {}]
  %s8 = sld [smem:[#allocation0]]
  $region38: #{tpu_custom_call.1} parent=0
    _
  %s10 = ssub.s32 1, %s8
  %s11 = scalar_select 0, %s10, %s8
  $region1: #{tpu_custom_call.1} parent=0
    #allocation2 [shape = 'u8[4096]{0}', space=vmem, size = 0x1000, scoped, tag = 'output window, operand 0, single buffered']
    #allocation3 [shape = 's32[1]{0}', space=sflag, size = 0x4, scoped, tag = 'scoped memory for tpu_custom_call.1']
    %12 = vsyncpa [#allocation3], 0
    // Predicated region
    $region2: #{tpu_custom_call.1} parent=1 // pred_check
      _
    $region3: #{tpu_custom_call.1} parent=1 // pred_check_branch
      %14 = sbr.rel (0) target = $region5
    $region4: #{tpu_custom_call.1} parent=1 // pred_region
      _
    $region5: #{tpu_custom_call.1} parent=1 // pred_fallthru
      _
    // Predicated region
    $region6: #{tpu_custom_call.1} parent=1 // pred_check
      _
    $region7: #{tpu_custom_call.1} parent=1 // pred_check_branch
      %16 = sbr.rel (0) target = $region9
    $region8: #{tpu_custom_call.1} parent=1 // pred_region
      _
    $region9: #{tpu_custom_call.1} parent=1 // pred_fallthru
      _
    // Predicated region
    $region10: #{tpu_custom_call.1} parent=1 // pred_check
      _
    $region11: #{tpu_custom_call.1} parent=1 // pred_check_branch
      %18 = sbr.rel (0) target = $region13
    $region12: #{tpu_custom_call.1} parent=1 // pred_region
      _
    $region13: #{tpu_custom_call.1} parent=1 // pred_fallthru
      _
    // Predicated region
    $region14: #{tpu_custom_call.1} parent=1 // pred_check
      _
    $region15: #{tpu_custom_call.1} parent=1 // pred_check_branch
      %20 = sbr.rel (0) target = $region17
    $region16: #{tpu_custom_call.1} parent=1 // pred_region
      _
    $region17: #{tpu_custom_call.1} parent=1 // pred_fallthru
      _
    // Predicated region
    $region18: #{tpu_custom_call.1} parent=1 // pred_check
      _
    $region19: #{tpu_custom_call.1} parent=1 // pred_check_branch
      %22 = sbr.rel (0) target = $region21
    $region20: #{tpu_custom_call.1} parent=1 // pred_region
      _
    $region21: #{tpu_custom_call.1} parent=1 // pred_fallthru
      _
    // Predicated region
    $region22: #{tpu_custom_call.1} parent=1 // pred_check
      _
    $region23: #{tpu_custom_call.1} parent=1 // pred_check_branch
      %24 = sbr.rel (0) target = $region25
    $region24: #{tpu_custom_call.1} parent=1 // pred_region
      _
    $region25: #{tpu_custom_call.1} parent=1 // pred_fallthru
      _
    // Predicated region
    $region26: #{tpu_custom_call.1} parent=1 // pred_check
      _
    $region27: #{tpu_custom_call.1} parent=1 // pred_check_branch
      %26 = sbr.rel (0) target = $region29
    $region28: #{tpu_custom_call.1} parent=1 // pred_region
      _
    $region29: #{tpu_custom_call.1} parent=1 // pred_fallthru
      _
    %v28 = vld [vmem:[%s0] sm:$0xff]
    %v29 = vld [vmem:[%s1] sm:$0xff]
    %v30 = vld [vmem:[%s2] sm:$0x1]
    %v32 = vlaneseq
    %v33 = vshrl.u32 %v32, 7
    %v34 = vsub.s32 0, %v33
    %v35 = vrot.slane %v30, %v34
    %vm37 = vcmask 64512
    %v39 = vsel %vm37, %v28, 0
    %41 = vmatprep.subr.mxu0 0.0
    %42 = vmatpush1.msra.mxu0 %v29
    %43 = vmatprep.subr.mxu0 0.0
    %44 = vmatpush1.msra.mxu0 0.0
    %45 = vmatprep.subr.mxu0 0.0
    %46 = vmatpush1.msra.mxu0 0.0
    %47 = vmatprep.subr.mxu0 0.0
    %48 = vmatpush1.msra.mxu0 0.0
    %49 = vmatprep.subr.mxu0 0.0
    %50 = vmatpush1.msra.mxu0 0.0
    %51 = vmatprep.subr.mxu0 0.0
    %52 = vmatpush1.msra.mxu0 0.0
    %53 = vmatprep.subr.mxu0 0.0
    %54 = vmatpush1.msra.mxu0 0.0
    %55 = vmatprep.subr.mxu0 0.0
    %56 = vmatpush1.msra.mxu0 0.0
    %57 = vmatprep.subr.mxu0 0.0
    %58 = vmatpush1.msra.mxu0 0.0
    %59 = vmatprep.subr.mxu0 0.0
    %60 = vmatpush1.msra.mxu0 0.0
    %61 = vmatprep.subr.mxu0 0.0
    %62 = vmatpush1.msra.mxu0 0.0
    %63 = vmatprep.subr.mxu0 0.0
    %64 = vmatpush1.msra.mxu0 0.0
    %65 = vmatprep.subr.mxu0 0.0
    %66 = vmatpush1.msra.mxu0 0.0
    %67 = vmatprep.subr.mxu0 0.0
    %68 = vmatpush1.msra.mxu0 0.0
    %69 = vmatprep.subr.mxu0 0.0
    %70 = vmatpush1.msra.mxu0 0.0
    %71 = vmatprep.subr.mxu0 0.0
    %72 = vmatpush1.msra.mxu0 0.0
    %73 = vmatprep.subr.mxu0 0.0
    %74 = vmatpush1.msra.mxu0 0.0
    %75 = vmatprep.subr.mxu0 0.0
    %76 = vmatpush1.msra.mxu0 0.0
    %77 = vmatprep.subr.mxu0 0.0
    %78 = vmatpush1.msra.mxu0 0.0
    %79 = vmatprep.subr.mxu0 0.0
    %80 = vmatpush1.msra.mxu0 0.0
    %81 = vmatprep.subr.mxu0 0.0
    %82 = vmatpush1.msra.mxu0 0.0
    %83 = vmatprep.subr.mxu0 0.0
    %84 = vmatpush1.msra.mxu0 0.0
    %85 = vmatprep.subr.mxu0 0.0
    %86 = vmatpush1.msra.mxu0 0.0
    %87 = vmatprep.subr.mxu0 0.0
    %88 = vmatpush1.msra.mxu0 0.0
    %89 = vmatprep.subr.mxu0 0.0
    %90 = vmatpush1.msra.mxu0 0.0
    %91 = vmatprep.subr.mxu0 0.0
    %92 = vmatpush1.msra.mxu0 0.0
    %93 = vmatprep.subr.mxu0 0.0
    %94 = vmatpush1.msra.mxu0 0.0
    %95 = vmatprep.subr.mxu0 0.0
    %96 = vmatpush1.msra.mxu0 0.0
    %97 = vmatprep.subr.mxu0 0.0
    %98 = vmatpush1.msra.mxu0 0.0
    %99 = vmatprep.subr.mxu0 0.0
    %100 = vmatpush1.msra.mxu0 0.0
    %101 = vmatprep.subr.mxu0 0.0
    %102 = vmatpush1.msra.mxu0 0.0
    %103 = vmatprep.subr.mxu0 0.0
    %104 = vmatpush1.msra.mxu0 0.0
    %105 = vmatprep.mubr.f32.mxu0 0.0
    %106 = vmatmul.mubr.f32.gmra.mrb[0].mxu0 %v39
    %v107 = vpop.f32.mrb[0].mxu0
    %v108 = vadd.f32 %v35, %v107
    %v109 = vpop.f32.mrb[0].mxu0
    %110 = vdwg.mxu0
    %v111 = vmax.f32 %v108, 0.0
    %v112 = vpack.c.bf16 %v111, %v111
    %v113 = vld [vmem:[%s3] sm:$0xf]
    %v114 = vld [vmem:[%s3 + $0x4] sm:$0xf]
    %v115 = vld [vmem:[%s3 + $0x8] sm:$0xf]
    %v116 = vld [vmem:[%s3 + $0xc] sm:$0xf]
    %v117 = vld [vmem:[%s3 + $0x10] sm:$0xf]
    %v118 = vld [vmem:[%s3 + $0x14] sm:$0xf]
    %v119 = vld [vmem:[%s3 + $0x18] sm:$0xf]
    %v120 = vld [vmem:[%s3 + $0x1c] sm:$0xf]
    %v121 = vld [vmem:[%s3 + $0x20] sm:$0xf]
    %v122 = vld [vmem:[%s3 + $0x24] sm:$0xf]
    %v123 = vld [vmem:[%s3 + $0x28] sm:$0xf]
    %v124 = vld [vmem:[%s3 + $0x2c] sm:$0xf]
    %v125 = vld [vmem:[%s3 + $0x30] sm:$0xf]
    %v126 = vld [vmem:[%s3 + $0x34] sm:$0xf]
    %v127 = vld [vmem:[%s3 + $0x38] sm:$0xf]
    %v128 = vld [vmem:[%s3 + $0x3c] sm:$0xf]
    %v129 = vld [vmem:[%s4] sm:$0x1]
    %v131 = vlaneseq
    %v132 = vshrl.u32 %v131, 7
    %v133 = vsub.s32 0, %v132
    %v134 = vrot.slane %v129, %v133
    %v152 = vunpack.c.l.b16 %v113
    %v153 = vunpack.c.l.b16 %v114
    %v154 = vunpack.c.l.b16 %v115
    %v155 = vunpack.c.l.b16 %v116
    %v156 = vunpack.c.l.b16 %v117
    %v157 = vunpack.c.l.b16 %v118
    %v158 = vunpack.c.l.b16 %v119
    %v159 = vunpack.c.l.b16 %v120
    %v160 = vunpack.c.l.b16 %v121
    %v161 = vunpack.c.l.b16 %v122
    %v162 = vunpack.c.l.b16 %v123
    %v163 = vunpack.c.l.b16 %v124
    %v164 = vunpack.c.l.b16 %v125
    %v165 = vunpack.c.l.b16 %v126
    %v166 = vunpack.c.l.b16 %v127
    %v167 = vunpack.c.l.b16 %v128
    %v168 = vpack.c.b16 %v153, %v152
    %v169 = vpack.c.b16 %v155, %v154
    %v170 = vpack.c.b16 %v157, %v156
    %v171 = vpack.c.b16 %v159, %v158
    %v172 = vpack.c.b16 %v161, %v160
    %v173 = vpack.c.b16 %v163, %v162
    %v174 = vpack.c.b16 %v165, %v164
    %v175 = vpack.c.b16 %v167, %v166
    %184 = vmatprep.subr.bf16.mxu0 0
    %185 = vmatpush1.bf16.msra.mxu0 %v168
    %186 = vmatprep.subr.bf16.mxu0 0
    %187 = vmatpush1.bf16.msra.mxu0 %v169
    %188 = vmatprep.subr.bf16.mxu0 0
    %189 = vmatpush1.bf16.msra.mxu0 %v170
    %190 = vmatprep.subr.bf16.mxu0 0
    %191 = vmatpush1.bf16.msra.mxu0 %v171
    %192 = vmatprep.subr.bf16.mxu0 0
    %193 = vmatpush1.bf16.msra.mxu0 %v172
    %194 = vmatprep.subr.bf16.mxu0 0
    %195 = vmatpush1.bf16.msra.mxu0 %v173
    %196 = vmatprep.subr.bf16.mxu0 0
    %197 = vmatpush1.bf16.msra.mxu0 %v174
    %198 = vmatprep.subr.bf16.mxu0 0
    %199 = vmatpush1.bf16.msra.mxu0 %v175
    %200 = vmatprep.subr.bf16.mxu0 0
    %201 = vmatpush1.bf16.msra.mxu0 0
    %202 = vmatprep.subr.bf16.mxu0 0
    %203 = vmatpush1.bf16.msra.mxu0 0
    %204 = vmatprep.subr.bf16.mxu0 0
    %205 = vmatpush1.bf16.msra.mxu0 0
    %206 = vmatprep.subr.bf16.mxu0 0
    %207 = vmatpush1.bf16.msra.mxu0 0
    %208 = vmatprep.subr.bf16.mxu0 0
    %209 = vmatpush1.bf16.msra.mxu0 0
    %210 = vmatprep.subr.bf16.mxu0 0
    %211 = vmatpush1.bf16.msra.mxu0 0
    %212 = vmatprep.subr.bf16.mxu0 0
    %213 = vmatpush1.bf16.msra.mxu0 0
    %214 = vmatprep.subr.bf16.mxu0 0
    %215 = vmatpush1.bf16.msra.mxu0 0
    %216 = vmatprep.mubr.bf16.mxu0 0
    %217 = vmatmul.mubr.bf16.gmra.mrb[0].mxu0 %v112
    %v218 = vpop.f32.mrb[0].mxu0
    %v219 = vadd.f32 %v134, %v218
    %v220 = vpop.f32.mrb[0].mxu0
    %v221 = vpop.f32.mrb[0].mxu0
    %v222 = vpop.f32.mrb[0].mxu0
    %223 = vdwg.mxu0
    %v224 = vmax.f32 %v219, 0.0
    %v225 = vpack.c.bf16 %v224, %v224
    %v226 = vld [vmem:[%s5] sm:$0xf]
    %v227 = vld [vmem:[%s5 + $0x4] sm:$0xf]
    %v228 = vld [vmem:[%s5 + $0x8] sm:$0xf]
    %v229 = vld [vmem:[%s5 + $0xc] sm:$0xf]
    %v230 = vld [vmem:[%s5 + $0x10] sm:$0xf]
    %v231 = vld [vmem:[%s5 + $0x14] sm:$0xf]
    %v232 = vld [vmem:[%s5 + $0x18] sm:$0xf]
    %v233 = vld [vmem:[%s5 + $0x1c] sm:$0xf]
    %v234 = vld [vmem:[%s5 + $0x20] sm:$0xf]
    %v235 = vld [vmem:[%s5 + $0x24] sm:$0xf]
    %v236 = vld [vmem:[%s5 + $0x28] sm:$0xf]
    %v237 = vld [vmem:[%s5 + $0x2c] sm:$0xf]
    %v238 = vld [vmem:[%s5 + $0x30] sm:$0xf]
    %v239 = vld [vmem:[%s5 + $0x34] sm:$0xf]
    %v240 = vld [vmem:[%s5 + $0x38] sm:$0xf]
    %v241 = vld [vmem:[%s5 + $0x3c] sm:$0xf]
    %v242 = vld [vmem:[%s6] sm:$0x1]
    %v244 = vlaneseq
    %v245 = vshrl.u32 %v244, 7
    %v246 = vsub.s32 0, %v245
    %v247 = vrot.slane %v242, %v246
    %v265 = vunpack.c.l.b16 %v226
    %v266 = vunpack.c.l.b16 %v227
    %v267 = vunpack.c.l.b16 %v228
    %v268 = vunpack.c.l.b16 %v229
    %v269 = vunpack.c.l.b16 %v230
    %v270 = vunpack.c.l.b16 %v231
    %v271 = vunpack.c.l.b16 %v232
    %v272 = vunpack.c.l.b16 %v233
    %v273 = vunpack.c.l.b16 %v234
    %v274 = vunpack.c.l.b16 %v235
    %v275 = vunpack.c.l.b16 %v236
    %v276 = vunpack.c.l.b16 %v237
    %v277 = vunpack.c.l.b16 %v238
    %v278 = vunpack.c.l.b16 %v239
    %v279 = vunpack.c.l.b16 %v240
    %v280 = vunpack.c.l.b16 %v241
    %v281 = vpack.c.b16 %v266, %v265
    %v282 = vpack.c.b16 %v268, %v267
    %v283 = vpack.c.b16 %v270, %v269
    %v284 = vpack.c.b16 %v272, %v271
    %v285 = vpack.c.b16 %v274, %v273
    %v286 = vpack.c.b16 %v276, %v275
    %v287 = vpack.c.b16 %v278, %v277
    %v288 = vpack.c.b16 %v280, %v279
    %297 = vmatprep.subr.bf16.mxu0 0
    %298 = vmatpush1.bf16.msra.mxu0 %v281
    %299 = vmatprep.subr.bf16.mxu0 0
    %300 = vmatpush1.bf16.msra.mxu0 %v282
    %301 = vmatprep.subr.bf16.mxu0 0
    %302 = vmatpush1.bf16.msra.mxu0 %v283
    %303 = vmatprep.subr.bf16.mxu0 0
    %304 = vmatpush1.bf16.msra.mxu0 %v284
    %305 = vmatprep.subr.bf16.mxu0 0
    %306 = vmatpush1.bf16.msra.mxu0 %v285
    %307 = vmatprep.subr.bf16.mxu0 0
    %308 = vmatpush1.bf16.msra.mxu0 %v286
    %309 = vmatprep.subr.bf16.mxu0 0
    %310 = vmatpush1.bf16.msra.mxu0 %v287
    %311 = vmatprep.subr.bf16.mxu0 0
    %312 = vmatpush1.bf16.msra.mxu0 %v288
    %313 = vmatprep.subr.bf16.mxu0 0
    %314 = vmatpush1.bf16.msra.mxu0 0
    %315 = vmatprep.subr.bf16.mxu0 0
    %316 = vmatpush1.bf16.msra.mxu0 0
    %317 = vmatprep.subr.bf16.mxu0 0
    %318 = vmatpush1.bf16.msra.mxu0 0
    %319 = vmatprep.subr.bf16.mxu0 0
    %320 = vmatpush1.bf16.msra.mxu0 0
    %321 = vmatprep.subr.bf16.mxu0 0
    %322 = vmatpush1.bf16.msra.mxu0 0
    %323 = vmatprep.subr.bf16.mxu0 0
    %324 = vmatpush1.bf16.msra.mxu0 0
    %325 = vmatprep.subr.bf16.mxu0 0
    %326 = vmatpush1.bf16.msra.mxu0 0
    %327 = vmatprep.subr.bf16.mxu0 0
    %328 = vmatpush1.bf16.msra.mxu0 0
    %329 = vmatprep.mubr.bf16.mxu0 0
    %330 = vmatmul.mubr.bf16.gmra.mrb[0].mxu0 %v225
    %v331 = vpop.f32.mrb[0].mxu0
    %v332 = vadd.f32 %v247, %v331
    %v333 = vpop.f32.mrb[0].mxu0
    %v334 = vpop.f32.mrb[0].mxu0
    %v335 = vpop.f32.mrb[0].mxu0
    %336 = vdwg.mxu0
    %vm337 = vcmask 31744
    %338 = vst.msk [vmem:[#allocation2] sm:$0xff] %vm337, %v332
    // Predicated region
    $region30: #{tpu_custom_call.1} parent=1 // pred_check
      _
    $region31: #{tpu_custom_call.1} parent=1 // pred_check_branch
      %340 = sbr.rel (0) target = $region33
    $region32: #{tpu_custom_call.1} parent=1 // pred_region
      %s342 = ssub.s32 128, 32
      %343 = vsyncadd [#allocation3], %s342
      %s344 = sshll.u32 [#allocation2], 4
      %s345 = int_to_ptr.vmem [resolvable:$true] %s344
      %350 = dma.vmem_to_hbm [thread:$0]  %s345, 32, %s7, [#allocation3], 32, 32, 2
    $region33: #{tpu_custom_call.1} parent=1 // pred_fallthru
      _
    // Predicated region
    $region34: #{tpu_custom_call.1} parent=1 // pred_check
      _
    $region35: #{tpu_custom_call.1} parent=1 // pred_check_branch
      %352 = sbr.rel (0) target = $region37
    $region36: #{tpu_custom_call.1} parent=1 // pred_region
      %353 = dma.done [#allocation3], 128
    $region37: #{tpu_custom_call.1} parent=1 // pred_fallthru
      _
    %354 = vsyncpa [#allocation3], 1

</llo_original>
